<compile_context>
chip_gen: v5e
topology: v5e:2x2
jax: 0.10.0
libtpu: 0.0.40
codegen_flags: <defaults>
</compile_context>

<pallas_src>
import jax
import jax.numpy as jnp
from jax import lax
from jax.experimental import pallas as pl
from jax.experimental.pallas import tpu as pltpu


LANES = 128        # pad all channel-like dims to the 128-lane vreg width
C_OUT = 16         # conv output channels
K_PATCH = 48       # 3 * 4 * 4 im2col patch features
FC1_OUT = 30
FC2_OUT = 3


# ------------------------------ Pallas kernel -------------------------------

def vgg_fused_kernel(patches_ref, wc_ref, bc_ref, w1_ref, b1_ref, w2_ref,
                     b2_ref, out_ref):
    """Conv (im2col matmul) + bias + ReLU + 8x8 maxpool + FC1 + ReLU + FC2.

    patches_ref: (4, TILE*64, 48) bf16  dim0 = pool window p = ph*2+pw,
                                        rows = n*64 + i*8 + j
    wc_ref:      (48, 128)        bf16  conv weight, cols 0:16 valid
    bc_ref:      (1, 128)         f32
    w1_ref:      (4, 128, 128)    bf16  FC1 weight with folded flatten perm
    b1_ref:      (1, 128)         f32
    w2_ref:      (128, 128)       bf16  FC2 weight, [0:30, 0:3] valid
    b2_ref:      (1, 128)         f32
    out_ref:     (TILE, 128)      f32   cols 0:3 valid
    """
    tile = out_ref.shape[0]
    acc = jnp.zeros((tile, LANES), jnp.float32)
    # Static unroll over the 4 max-pool windows p = ph*2 + pw.
    for p in range(4):
        # im2col conv as one lane-dense MXU matmul (bf16 x bf16 -> f32 acc).
        h = jnp.dot(patches_ref[p], wc_ref[...],
                    preferred_element_type=jnp.float32)
        h = jnp.maximum(h + bc_ref[...], 0.0)                 # bias + ReLU
        # 8x8/8 max-pool: every pool window is 64 consecutive rows (lane-dense
        # 128-wide reduce, per review).
        pooled = jnp.max(h.reshape(tile, 64, LANES), axis=1)  # (TILE, 128)
        # FC1 contribution of this pool window (flatten permutation folded
        # into w1 on the host); keep activations f32, upcast bf16 weight.
        acc = acc + jnp.dot(pooled, w1_ref[p].astype(jnp.float32),
                            preferred_element_type=jnp.float32)
    h1 = jnp.maximum(acc + b1_ref[...], 0.0)
    # TODO(synk): nn.Dropout(p=0.5) is identity at inference; training-mode
    #             stochastic masking is intentionally not implemented.
    out = jnp.dot(h1, w2_ref[...].astype(jnp.float32),
                  preferred_element_type=jnp.float32) + b2_ref[...]
    out_ref[...] = out.astype(out_ref.dtype)


# --------------------------------- host glue --------------------------------

def _im2col_window_major(x):
    """x: (N, 3, 32, 32) f32 -> patches (4, N*64, 48) bf16.

    Built from strided slices + reshapes/transposes only (no XLA gather).
      dim0 = pool window p = ph*2 + pw
      dim1 = n*64 + i*8 + j            (oh = ph*8 + i, ow = pw*8 + j)
      dim2 = ci*16 + kh*4 + kw         (matches OIHW conv-weight flattening)
    # TODO(synk): patches still inflate HBM read traffic ~4x vs the raw image;
    # doing the 4x4 tap expansion inside the kernel (or allow_input_fusion on
    # this operand) would remove that — left out to keep lowering simple.
    """
    n = x.shape[0]
    xp = jnp.pad(x.astype(jnp.bfloat16), ((0, 0), (0, 0), (1, 1), (1, 1)))
    slabs = []
    for kh in range(4):
        for kw in range(4):
            slabs.append(xp[:, :, kh:kh + 31:2, kw:kw + 31:2])  # (N,3,16,16)
    p = jnp.stack(slabs, 0).reshape(4, 4, n, 3, 16, 16)   # (kh,kw,n,ci,oh,ow)
    p = p.transpose(2, 4, 5, 3, 0, 1)                     # (n,oh,ow,ci,kh,kw)
    p = p.reshape(n, 2, 8, 2, 8, 3, 4, 4)                 # (n,ph,i,pw,j,ci,kh,kw)
    p = p.transpose(1, 3, 0, 2, 4, 5, 6, 7)               # (ph,pw,n,i,j,ci,kh,kw)
    return p.reshape(4, n * 64, K_PATCH)


def _pick_tile_and_vmem():
    """Per-generation batch tile and VMEM limit (review: v7x 64 MiB VMEM)."""
    try:
        kind = jax.devices()[0].device_kind.lower()
    except Exception:
        kind = ""
    if "v6" in kind:                    # 128 MiB VMEM: big tiles amortize best
        return 512, 100 * 1024 * 1024
    if "v5" in kind:                    # v5e: 128 MiB VMEM, 16 MiB scoped default
        return 256, 96 * 1024 * 1024
    return 256, 56 * 1024 * 1024        # v7x (64 MiB VMEM) and unknown: be safe


def _prepare_params(params):
    """Pad/permute weights once on the host into lane-dense bf16 matrices."""
    conv_w, conv_b, fc1_w, fc1_b, fc2_w, fc2_b = params
    f32, bf16 = jnp.float32, jnp.bfloat16
    # Conv: OIHW (16,3,4,4) -> (48,16) with rows ordered (ci,kh,kw) -> pad to 128.
    wc = jnp.zeros((K_PATCH, LANES), bf16).at[:, :C_OUT].set(
        conv_w.reshape(C_OUT, K_PATCH).T.astype(bf16))
    bc = jnp.zeros((1, LANES), f32).at[:, :C_OUT].set(conv_b.astype(f32)[None])
    # FC1 with the NCHW flatten permutation folded in: torch feature
    # f = c*4 + p  (p = ph*2 + pw), so W1f[p, c, o] = fc1_w[o, c*4 + p].
    w1_pco = fc1_w.T.reshape(C_OUT, 4, FC1_OUT).transpose(1, 0, 2)  # (p, c, o)
    w1 = jnp.zeros((4, LANES, LANES), bf16).at[:, :C_OUT, :FC1_OUT].set(
        w1_pco.astype(bf16))
    b1 = jnp.zeros((1, LANES), f32).at[:, :FC1_OUT].set(fc1_b.astype(f32)[None])
    w2 = jnp.zeros((LANES, LANES), bf16).at[:FC1_OUT, :FC2_OUT].set(
        fc2_w.T.astype(bf16))
    b2 = jnp.zeros((1, LANES), f32).at[:, :FC2_OUT].set(fc2_b.astype(f32)[None])
    return wc, bc, w1, b1, w2, b2


def vgg_forward(x, params):
    n = x.shape[0]
    tile_cap, vmem_limit = _pick_tile_and_vmem()
    tile = min(tile_cap, n)                       # tile == n, or tile in {256,512}
    n_pad = pl.cdiv(n, tile) * tile
    if n_pad != n:
        x = jnp.pad(x, ((0, n_pad - n), (0, 0), (0, 0), (0, 0)))

    patches = _im2col_window_major(x)             # (4, n_pad*64, 48) bf16
    wc, bc, w1, b1, w2, b2 = _prepare_params(params)

    grid = (n_pad // tile,)
    flops = 2 * n_pad * (256 * K_PATCH * LANES + 4 * LANES * LANES
                         + LANES * LANES)
    bytes_accessed = (patches.size * 2
                      + (wc.size + w1.size + w2.size) * 2
                      + (bc.size + b1.size + b2.size) * 4
                      + n_pad * LANES * 4)

    out = pl.pallas_call(
        vgg_fused_kernel,
        out_shape=jax.ShapeDtypeStruct((n_pad, LANES), jnp.float32),
        grid=grid,
        in_specs=[
            pl.BlockSpec((4, tile * 64, K_PATCH), lambda b: (0, b, 0)),
            pl.BlockSpec((K_PATCH, LANES), lambda b: (0, 0)),
            pl.BlockSpec((1, LANES), lambda b: (0, 0)),
            pl.BlockSpec((4, LANES, LANES), lambda b: (0, 0, 0)),
            pl.BlockSpec((1, LANES), lambda b: (0, 0)),
            pl.BlockSpec((LANES, LANES), lambda b: (0, 0)),
            pl.BlockSpec((1, LANES), lambda b: (0, 0)),
        ],
        out_specs=pl.BlockSpec((tile, LANES), lambda b: (b, 0)),
        compiler_params=pltpu.CompilerParams(
            dimension_semantics=("parallel",),     # shards batch over 2 TCs on v7x
            vmem_limit_bytes=vmem_limit,
        ),
        cost_estimate=pl.CostEstimate(
            flops=flops, transcendentals=0, bytes_accessed=bytes_accessed),
    )(patches, wc, bc, w1, b1, w2, b2)

    return out[:n, :FC2_OUT]                      # drop batch pad + lane pad


# ------------------------------ reference path ------------------------------

def init_params(key):
    ks = jax.random.split(key, 6)

    def u(k, shape, fan_in):
        bound = 1.0 / jnp.sqrt(jnp.float32(fan_in))
        return jax.random.uniform(k, shape, jnp.float32, -bound, bound)

    conv_w = u(ks[0], (16, 3, 4, 4), 3 * 4 * 4)   # OIHW, like nn.Conv2d
    conv_b = u(ks[1], (16,), 3 * 4 * 4)
    fc1_w = u(ks[2], (30, 64), 64)                # (out, in), like nn.Linear
    fc1_b = u(ks[3], (30,), 64)
    fc2_w = u(ks[4], (3, 30), 30)
    fc2_b = u(ks[5], (3,), 30)
    return conv_w, conv_b, fc1_w, fc1_b, fc2_w, fc2_b


def vgg_reference(x, params):
    """Pure-JAX f32 reference matching the PyTorch forward (eval mode)."""
    conv_w, conv_b, fc1_w, fc1_b, fc2_w, fc2_b = params
    h = lax.conv_general_dilated(
        x, conv_w, window_strides=(2, 2), padding=((1, 1), (1, 1)),
        dimension_numbers=("NCHW", "OIHW", "NCHW"))
    h = h + conv_b.reshape(1, -1, 1, 1)
    h = jnp.maximum(h, 0.0)
    h = lax.reduce_window(h, -jnp.inf, lax.max, (1, 1, 8, 8), (1, 1, 8, 8),
                          "VALID")
    f = h.reshape(x.shape[0], -1)
    f = jnp.maximum(f @ fc1_w.T + fc1_b, 0.0)
    return f @ fc2_w.T + fc2_b


if __name__ == "__main__":
    key = jax.random.PRNGKey(0)
    kx, kp = jax.random.split(key)
    x = jax.random.normal(kx, (2, 3, 32, 32), jnp.float32)   # NCHW, batch=2
    params = init_params(kp)

    fwd = jax.jit(vgg_forward)
    out = jax.block_until_ready(fwd(x, params))
    ref = jax.block_until_ready(vgg_reference(x, params))

    assert out.shape == (2, 3), out.shape
    # Tolerance covers bf16 quantization of patches/weights vs. the f32 reference
    # (measured error is ~3e-3; f32 accumulation is kept on all matmuls).
    assert jnp.allclose(out, ref, atol=2e-2, rtol=2e-2), (out, ref)
    print("KERNEL_OK")
</pallas_src>

<mosaic_0001>
module attributes {stable_mosaic.version = 11 : i64} {
  func.func @vgg_fused_kernel(%arg0: i32, %arg1: memref<4x128x48xbf16, #tpu.memory_space<vmem>>, %arg2: memref<48x128xbf16, #tpu.memory_space<vmem>>, %arg3: memref<1x128xf32, #tpu.memory_space<vmem>>, %arg4: memref<4x128x128xbf16, #tpu.memory_space<vmem>>, %arg5: memref<1x128xf32, #tpu.memory_space<vmem>>, %arg6: memref<128x128xbf16, #tpu.memory_space<vmem>>, %arg7: memref<1x128xf32, #tpu.memory_space<vmem>>, %arg8: memref<2x128xf32, #tpu.memory_space<vmem>>) attributes {dimension_semantics = [#tpu.dimension_semantics<parallel>], iteration_bounds = array<i64: 1>, scalar_prefetch = 0 : i64, scratch_operands = 0 : i64, tpu.core_type = #tpu.core_type<tc>, window_params = [{transform_indices = @transform_0, window_bounds = array<i64: 4, 128, 48>}, {pipeline_mode = #tpu.pipeline_mode<synchronous>, transform_indices = @transform_1, window_bounds = array<i64: 48, 128>}, {pipeline_mode = #tpu.pipeline_mode<synchronous>, transform_indices = @transform_2, window_bounds = array<i64: 1, 128>}, {pipeline_mode = #tpu.pipeline_mode<synchronous>, transform_indices = @transform_3, window_bounds = array<i64: 4, 128, 128>}, {pipeline_mode = #tpu.pipeline_mode<synchronous>, transform_indices = @transform_4, window_bounds = array<i64: 1, 128>}, {pipeline_mode = #tpu.pipeline_mode<synchronous>, transform_indices = @transform_5, window_bounds = array<i64: 128, 128>}, {pipeline_mode = #tpu.pipeline_mode<synchronous>, transform_indices = @transform_6, window_bounds = array<i64: 1, 128>}, {transform_indices = @transform_7, window_bounds = array<i64: 2, 128>}]} {
    %cst = arith.constant 0.000000e+00 : f32
    %0 = vector.broadcast %cst : f32 to vector<2x128xf32>
    %c0 = arith.constant 0 : index
    %c0_0 = arith.constant 0 : index
    %c0_1 = arith.constant 0 : index
    %1 = vector.load %arg1[%c0, %c0_0, %c0_1] : memref<4x128x48xbf16, #tpu.memory_space<vmem>>, vector<1x128x48xbf16>
    %2 = vector.shape_cast %1 : vector<1x128x48xbf16> to vector<128x48xbf16>
    %c0_2 = arith.constant 0 : index
    %c0_3 = arith.constant 0 : index
    %3 = vector.load %arg2[%c0_2, %c0_3] : memref<48x128xbf16, #tpu.memory_space<vmem>>, vector<48x128xbf16>
    %cst_4 = arith.constant dense<0.000000e+00> : vector<128x128xf32>
    %4 = tpu.matmul %2, %3, %cst_4 {dimension_numbers = #tpu.dot_dimension_numbers<[1], [0], [0], [1], [0, 0, 1, 1], [], []>} : vector<128x48xbf16>, vector<48x128xbf16>, vector<128x128xf32> -> vector<128x128xf32>
    %c0_5 = arith.constant 0 : index
    %c0_6 = arith.constant 0 : index
    %5 = vector.load %arg3[%c0_5, %c0_6] : memref<1x128xf32, #tpu.memory_space<vmem>>, vector<1x128xf32>
    %6 = vector.broadcast %5 : vector<1x128xf32> to vector<128x128xf32>
    %7 = arith.addf %4, %6 : vector<128x128xf32>
    %cst_7 = arith.constant 0.000000e+00 : f32
    %8 = vector.broadcast %cst_7 : f32 to vector<128x128xf32>
    %9 = arith.maximumf %7, %8 : vector<128x128xf32>
    %10 = vector.shape_cast %9 : vector<128x128xf32> to vector<2x64x128xf32>
    %cst_8 = arith.constant dense<0xFF800000> : vector<2x128xf32>
    %11 = vector.multi_reduction <maximumf>, %10, %cst_8 [1] : vector<2x64x128xf32> to vector<2x128xf32>
    %c0_9 = arith.constant 0 : index
    %c0_10 = arith.constant 0 : index
    %c0_11 = arith.constant 0 : index
    %12 = vector.load %arg4[%c0_9, %c0_10, %c0_11] : memref<4x128x128xbf16, #tpu.memory_space<vmem>>, vector<1x128x128xbf16>
    %13 = vector.shape_cast %12 : vector<1x128x128xbf16> to vector<128x128xbf16>
    %14 = arith.extf %13 : vector<128x128xbf16> to vector<128x128xf32>
    %cst_12 = arith.constant dense<0.000000e+00> : vector<2x128xf32>
    %15 = tpu.matmul %11, %14, %cst_12 {dimension_numbers = #tpu.dot_dimension_numbers<[1], [0], [0], [1], [0, 0, 1, 1], [], []>} : vector<2x128xf32>, vector<128x128xf32>, vector<2x128xf32> -> vector<2x128xf32>
    %16 = arith.addf %0, %15 : vector<2x128xf32>
    %c1 = arith.constant 1 : index
    %c0_13 = arith.constant 0 : index
    %c0_14 = arith.constant 0 : index
    %17 = vector.load %arg1[%c1, %c0_13, %c0_14] : memref<4x128x48xbf16, #tpu.memory_space<vmem>>, vector<1x128x48xbf16>
    %18 = vector.shape_cast %17 : vector<1x128x48xbf16> to vector<128x48xbf16>
    %c0_15 = arith.constant 0 : index
    %c0_16 = arith.constant 0 : index
    %19 = vector.load %arg2[%c0_15, %c0_16] : memref<48x128xbf16, #tpu.memory_space<vmem>>, vector<48x128xbf16>
    %cst_17 = arith.constant dense<0.000000e+00> : vector<128x128xf32>
    %20 = tpu.matmul %18, %19, %cst_17 {dimension_numbers = #tpu.dot_dimension_numbers<[1], [0], [0], [1], [0, 0, 1, 1], [], []>} : vector<128x48xbf16>, vector<48x128xbf16>, vector<128x128xf32> -> vector<128x128xf32>
    %c0_18 = arith.constant 0 : index
    %c0_19 = arith.constant 0 : index
    %21 = vector.load %arg3[%c0_18, %c0_19] : memref<1x128xf32, #tpu.memory_space<vmem>>, vector<1x128xf32>
    %22 = vector.broadcast %21 : vector<1x128xf32> to vector<128x128xf32>
    %23 = arith.addf %20, %22 : vector<128x128xf32>
    %cst_20 = arith.constant 0.000000e+00 : f32
    %24 = vector.broadcast %cst_20 : f32 to vector<128x128xf32>
    %25 = arith.maximumf %23, %24 : vector<128x128xf32>
    %26 = vector.shape_cast %25 : vector<128x128xf32> to vector<2x64x128xf32>
    %cst_21 = arith.constant dense<0xFF800000> : vector<2x128xf32>
    %27 = vector.multi_reduction <maximumf>, %26, %cst_21 [1] : vector<2x64x128xf32> to vector<2x128xf32>
    %c1_22 = arith.constant 1 : index
    %c0_23 = arith.constant 0 : index
    %c0_24 = arith.constant 0 : index
    %28 = vector.load %arg4[%c1_22, %c0_23, %c0_24] : memref<4x128x128xbf16, #tpu.memory_space<vmem>>, vector<1x128x128xbf16>
    %29 = vector.shape_cast %28 : vector<1x128x128xbf16> to vector<128x128xbf16>
    %30 = arith.extf %29 : vector<128x128xbf16> to vector<128x128xf32>
    %cst_25 = arith.constant dense<0.000000e+00> : vector<2x128xf32>
    %31 = tpu.matmul %27, %30, %cst_25 {dimension_numbers = #tpu.dot_dimension_numbers<[1], [0], [0], [1], [0, 0, 1, 1], [], []>} : vector<2x128xf32>, vector<128x128xf32>, vector<2x128xf32> -> vector<2x128xf32>
    %32 = arith.addf %16, %31 : vector<2x128xf32>
    %c2 = arith.constant 2 : index
    %c0_26 = arith.constant 0 : index
    %c0_27 = arith.constant 0 : index
    %33 = vector.load %arg1[%c2, %c0_26, %c0_27] : memref<4x128x48xbf16, #tpu.memory_space<vmem>>, vector<1x128x48xbf16>
    %34 = vector.shape_cast %33 : vector<1x128x48xbf16> to vector<128x48xbf16>
    %c0_28 = arith.constant 0 : index
    %c0_29 = arith.constant 0 : index
    %35 = vector.load %arg2[%c0_28, %c0_29] : memref<48x128xbf16, #tpu.memory_space<vmem>>, vector<48x128xbf16>
    %cst_30 = arith.constant dense<0.000000e+00> : vector<128x128xf32>
    %36 = tpu.matmul %34, %35, %cst_30 {dimension_numbers = #tpu.dot_dimension_numbers<[1], [0], [0], [1], [0, 0, 1, 1], [], []>} : vector<128x48xbf16>, vector<48x128xbf16>, vector<128x128xf32> -> vector<128x128xf32>
    %c0_31 = arith.constant 0 : index
    %c0_32 = arith.constant 0 : index
    %37 = vector.load %arg3[%c0_31, %c0_32] : memref<1x128xf32, #tpu.memory_space<vmem>>, vector<1x128xf32>
    %38 = vector.broadcast %37 : vector<1x128xf32> to vector<128x128xf32>
    %39 = arith.addf %36, %38 : vector<128x128xf32>
    %cst_33 = arith.constant 0.000000e+00 : f32
    %40 = vector.broadcast %cst_33 : f32 to vector<128x128xf32>
    %41 = arith.maximumf %39, %40 : vector<128x128xf32>
    %42 = vector.shape_cast %41 : vector<128x128xf32> to vector<2x64x128xf32>
    %cst_34 = arith.constant dense<0xFF800000> : vector<2x128xf32>
    %43 = vector.multi_reduction <maximumf>, %42, %cst_34 [1] : vector<2x64x128xf32> to vector<2x128xf32>
    %c2_35 = arith.constant 2 : index
    %c0_36 = arith.constant 0 : index
    %c0_37 = arith.constant 0 : index
    %44 = vector.load %arg4[%c2_35, %c0_36, %c0_37] : memref<4x128x128xbf16, #tpu.memory_space<vmem>>, vector<1x128x128xbf16>
    %45 = vector.shape_cast %44 : vector<1x128x128xbf16> to vector<128x128xbf16>
    %46 = arith.extf %45 : vector<128x128xbf16> to vector<128x128xf32>
    %cst_38 = arith.constant dense<0.000000e+00> : vector<2x128xf32>
    %47 = tpu.matmul %43, %46, %cst_38 {dimension_numbers = #tpu.dot_dimension_numbers<[1], [0], [0], [1], [0, 0, 1, 1], [], []>} : vector<2x128xf32>, vector<128x128xf32>, vector<2x128xf32> -> vector<2x128xf32>
    %48 = arith.addf %32, %47 : vector<2x128xf32>
    %c3 = arith.constant 3 : index
    %c0_39 = arith.constant 0 : index
    %c0_40 = arith.constant 0 : index
    %49 = vector.load %arg1[%c3, %c0_39, %c0_40] : memref<4x128x48xbf16, #tpu.memory_space<vmem>>, vector<1x128x48xbf16>
    %50 = vector.shape_cast %49 : vector<1x128x48xbf16> to vector<128x48xbf16>
    %c0_41 = arith.constant 0 : index
    %c0_42 = arith.constant 0 : index
    %51 = vector.load %arg2[%c0_41, %c0_42] : memref<48x128xbf16, #tpu.memory_space<vmem>>, vector<48x128xbf16>
    %cst_43 = arith.constant dense<0.000000e+00> : vector<128x128xf32>
    %52 = tpu.matmul %50, %51, %cst_43 {dimension_numbers = #tpu.dot_dimension_numbers<[1], [0], [0], [1], [0, 0, 1, 1], [], []>} : vector<128x48xbf16>, vector<48x128xbf16>, vector<128x128xf32> -> vector<128x128xf32>
    %c0_44 = arith.constant 0 : index
    %c0_45 = arith.constant 0 : index
    %53 = vector.load %arg3[%c0_44, %c0_45] : memref<1x128xf32, #tpu.memory_space<vmem>>, vector<1x128xf32>
    %54 = vector.broadcast %53 : vector<1x128xf32> to vector<128x128xf32>
    %55 = arith.addf %52, %54 : vector<128x128xf32>
    %cst_46 = arith.constant 0.000000e+00 : f32
    %56 = vector.broadcast %cst_46 : f32 to vector<128x128xf32>
    %57 = arith.maximumf %55, %56 : vector<128x128xf32>
    %58 = vector.shape_cast %57 : vector<128x128xf32> to vector<2x64x128xf32>
    %cst_47 = arith.constant dense<0xFF800000> : vector<2x128xf32>
    %59 = vector.multi_reduction <maximumf>, %58, %cst_47 [1] : vector<2x64x128xf32> to vector<2x128xf32>
    %c3_48 = arith.constant 3 : index
    %c0_49 = arith.constant 0 : index
    %c0_50 = arith.constant 0 : index
    %60 = vector.load %arg4[%c3_48, %c0_49, %c0_50] : memref<4x128x128xbf16, #tpu.memory_space<vmem>>, vector<1x128x128xbf16>
    %61 = vector.shape_cast %60 : vector<1x128x128xbf16> to vector<128x128xbf16>
    %62 = arith.extf %61 : vector<128x128xbf16> to vector<128x128xf32>
    %cst_51 = arith.constant dense<0.000000e+00> : vector<2x128xf32>
    %63 = tpu.matmul %59, %62, %cst_51 {dimension_numbers = #tpu.dot_dimension_numbers<[1], [0], [0], [1], [0, 0, 1, 1], [], []>} : vector<2x128xf32>, vector<128x128xf32>, vector<2x128xf32> -> vector<2x128xf32>
    %64 = arith.addf %48, %63 : vector<2x128xf32>
    %c0_52 = arith.constant 0 : index
    %c0_53 = arith.constant 0 : index
    %65 = vector.load %arg5[%c0_52, %c0_53] : memref<1x128xf32, #tpu.memory_space<vmem>>, vector<1x128xf32>
    %66 = vector.broadcast %65 : vector<1x128xf32> to vector<2x128xf32>
    %67 = arith.addf %64, %66 : vector<2x128xf32>
    %cst_54 = arith.constant 0.000000e+00 : f32
    %68 = vector.broadcast %cst_54 : f32 to vector<2x128xf32>
    %69 = arith.maximumf %67, %68 : vector<2x128xf32>
    %c0_55 = arith.constant 0 : index
    %c0_56 = arith.constant 0 : index
    %70 = vector.load %arg6[%c0_55, %c0_56] : memref<128x128xbf16, #tpu.memory_space<vmem>>, vector<128x128xbf16>
    %71 = arith.extf %70 : vector<128x128xbf16> to vector<128x128xf32>
    %cst_57 = arith.constant dense<0.000000e+00> : vector<2x128xf32>
    %72 = tpu.matmul %69, %71, %cst_57 {dimension_numbers = #tpu.dot_dimension_numbers<[1], [0], [0], [1], [0, 0, 1, 1], [], []>} : vector<2x128xf32>, vector<128x128xf32>, vector<2x128xf32> -> vector<2x128xf32>
    %c0_58 = arith.constant 0 : index
    %c0_59 = arith.constant 0 : index
    %73 = vector.load %arg7[%c0_58, %c0_59] : memref<1x128xf32, #tpu.memory_space<vmem>>, vector<1x128xf32>
    %74 = vector.broadcast %73 : vector<1x128xf32> to vector<2x128xf32>
    %75 = arith.addf %72, %74 : vector<2x128xf32>
    %c0_60 = arith.constant 0 : index
    %c0_61 = arith.constant 0 : index
    %76 = vector.load %arg8[%c0_60, %c0_61] : memref<2x128xf32, #tpu.memory_space<vmem>>, vector<2x128xf32>
    tpu.vector_store %arg8[%c0_60, %c0_61], %75 {strides = array<i32>} : memref<2x128xf32, #tpu.memory_space<vmem>>, vector<2x128xf32>,
    return
  }
  func.func @transform_0(%arg0: i32) -> (i32, i32, i32) {
    %c0_i32 = arith.constant 0 : i32
    %c0_i32_0 = arith.constant 0 : i32
    %c0_i32_1 = arith.constant 0 : i32
    return %c0_i32, %arg0, %c0_i32_0 : i32, i32, i32
  }
  func.func @transform_1(%arg0: i32) -> (i32, i32) {
    %c0_i32 = arith.constant 0 : i32
    %c0_i32_0 = arith.constant 0 : i32
    %c0_i32_1 = arith.constant 0 : i32
    return %c0_i32, %c0_i32_0 : i32, i32
  }
  func.func @transform_2(%arg0: i32) -> (i32, i32) {
    %c0_i32 = arith.constant 0 : i32
    %c0_i32_0 = arith.constant 0 : i32
    %c0_i32_1 = arith.constant 0 : i32
    return %c0_i32, %c0_i32_0 : i32, i32
  }
  func.func @transform_3(%arg0: i32) -> (i32, i32, i32) {
    %c0_i32 = arith.constant 0 : i32
    %c0_i32_0 = arith.constant 0 : i32
    %c0_i32_1 = arith.constant 0 : i32
    %c0_i32_2 = arith.constant 0 : i32
    return %c0_i32, %c0_i32_0, %c0_i32_1 : i32, i32, i32
  }
  func.func @transform_4(%arg0: i32) -> (i32, i32) {
    %c0_i32 = arith.constant 0 : i32
    %c0_i32_0 = arith.constant 0 : i32
    %c0_i32_1 = arith.constant 0 : i32
    return %c0_i32, %c0_i32_0 : i32, i32
  }
  func.func @transform_5(%arg0: i32) -> (i32, i32) {
    %c0_i32 = arith.constant 0 : i32
    %c0_i32_0 = arith.constant 0 : i32
    %c0_i32_1 = arith.constant 0 : i32
    return %c0_i32, %c0_i32_0 : i32, i32
  }
  func.func @transform_6(%arg0: i32) -> (i32, i32) {
    %c0_i32 = arith.constant 0 : i32
    %c0_i32_0 = arith.constant 0 : i32
    %c0_i32_1 = arith.constant 0 : i32
    return %c0_i32, %c0_i32_0 : i32, i32
  }
  func.func @transform_7(%arg0: i32) -> (i32, i32) {
    %c0_i32 = arith.constant 0 : i32
    %c0_i32_0 = arith.constant 0 : i32
    return %arg0, %c0_i32 : i32, i32
  }
}

</mosaic_0001>

<llo_original>
// kernel: vgg_forward.1
$region0: #{vgg_forward.1}
  #allocation0 [shape = 'u32[]', space=smem, size = 0x4, offset = 0x4, fixed_abs, tag = 'smem constant byte address 0x4 - core index']
  #allocation1 [shape = 'u32[72,128]{1,0:T(1,128)}', space=vmem, size = 0x9000, scoped, tag = 'internal scratch']
  %s0 = inlined_call_operand.vmem [shape: bf16[4,128,48], index: 0, kind: input, shape index: {}]
  %s1 = inlined_call_operand.vmem [shape: bf16[48,128], index: 1, kind: input, shape index: {}]
  %s2 = inlined_call_operand.vmem [shape: f32[1,128], index: 2, kind: input, shape index: {}]
  %s3 = inlined_call_operand.vmem [shape: bf16[4,128,128], index: 3, kind: input, shape index: {}]
  %s4 = inlined_call_operand.vmem [shape: f32[1,128], index: 4, kind: input, shape index: {}]
  %s5 = inlined_call_operand.vmem [shape: bf16[128,128], index: 5, kind: input, shape index: {}]
  %s6 = inlined_call_operand.vmem [shape: f32[1,128], index: 6, kind: input, shape index: {}]
  %s7 = inlined_call_operand.hbm [shape: f32[2,128], index: 7, kind: output, shape index: {}]
  %s8 = sld [smem:[#allocation0]]
  $region38: #{vgg_forward.1} parent=0
    _
  %s10 = ssub.s32 1, %s8
  %s11 = scalar_select 0, %s10, %s8
  $region1: #{vgg_forward.1} parent=0
    #allocation2 [shape = 'u8[1024]{0}', space=vmem, size = 0x400, scoped, tag = 'output window, operand 0, single buffered']
    #allocation3 [shape = 's32[1]{0}', space=sflag, size = 0x4, scoped, tag = 'scoped memory for vgg_forward.1']
    %12 = vsyncpa [#allocation3], 0
    // Predicated region
    $region2: #{vgg_forward.1} parent=1 // pred_check
      _
    $region3: #{vgg_forward.1} parent=1 // pred_check_branch
      %14 = sbr.rel (0) target = $region5
    $region4: #{vgg_forward.1} parent=1 // pred_region
      _
    $region5: #{vgg_forward.1} parent=1 // pred_fallthru
      _
    // Predicated region
    $region6: #{vgg_forward.1} parent=1 // pred_check
      _
    $region7: #{vgg_forward.1} parent=1 // pred_check_branch
      %16 = sbr.rel (0) target = $region9
    $region8: #{vgg_forward.1} parent=1 // pred_region
      _
    $region9: #{vgg_forward.1} parent=1 // pred_fallthru
      _
    // Predicated region
    $region10: #{vgg_forward.1} parent=1 // pred_check
      _
    $region11: #{vgg_forward.1} parent=1 // pred_check_branch
      %18 = sbr.rel (0) target = $region13
    $region12: #{vgg_forward.1} parent=1 // pred_region
      _
    $region13: #{vgg_forward.1} parent=1 // pred_fallthru
      _
    // Predicated region
    $region14: #{vgg_forward.1} parent=1 // pred_check
      _
    $region15: #{vgg_forward.1} parent=1 // pred_check_branch
      %20 = sbr.rel (0) target = $region17
    $region16: #{vgg_forward.1} parent=1 // pred_region
      _
    $region17: #{vgg_forward.1} parent=1 // pred_fallthru
      _
    // Predicated region
    $region18: #{vgg_forward.1} parent=1 // pred_check
      _
    $region19: #{vgg_forward.1} parent=1 // pred_check_branch
      %22 = sbr.rel (0) target = $region21
    $region20: #{vgg_forward.1} parent=1 // pred_region
      _
    $region21: #{vgg_forward.1} parent=1 // pred_fallthru
      _
    // Predicated region
    $region22: #{vgg_forward.1} parent=1 // pred_check
      _
    $region23: #{vgg_forward.1} parent=1 // pred_check_branch
      %24 = sbr.rel (0) target = $region25
    $region24: #{vgg_forward.1} parent=1 // pred_region
      _
    $region25: #{vgg_forward.1} parent=1 // pred_fallthru
      _
    // Predicated region
    $region26: #{vgg_forward.1} parent=1 // pred_check
      _
    $region27: #{vgg_forward.1} parent=1 // pred_check_branch
      %26 = sbr.rel (0) target = $region29
    $region28: #{vgg_forward.1} parent=1 // pred_region
      _
    $region29: #{vgg_forward.1} parent=1 // pred_fallthru
      _
    %v28 = vld [vmem:[%s0] sm:$0xf]
    %v29 = vld [vmem:[%s0 + $0x4] sm:$0xf]
    %v30 = vld [vmem:[%s0 + $0x8] sm:$0xf]
    %v31 = vld [vmem:[%s0 + $0xc] sm:$0xf]
    %v32 = vld [vmem:[%s0 + $0x10] sm:$0xf]
    %v33 = vld [vmem:[%s0 + $0x14] sm:$0xf]
    %v34 = vld [vmem:[%s0 + $0x18] sm:$0xf]
    %v35 = vld [vmem:[%s0 + $0x1c] sm:$0xf]
    %v36 = vld [vmem:[%s0 + $0x20] sm:$0xf]
    %v37 = vld [vmem:[%s0 + $0x24] sm:$0xf]
    %v38 = vld [vmem:[%s0 + $0x28] sm:$0xf]
    %v39 = vld [vmem:[%s0 + $0x2c] sm:$0xf]
    %v40 = vld [vmem:[%s0 + $0x30] sm:$0xf]
    %v41 = vld [vmem:[%s0 + $0x34] sm:$0xf]
    %v42 = vld [vmem:[%s0 + $0x38] sm:$0xf]
    %v43 = vld [vmem:[%s0 + $0x3c] sm:$0xf]
    %v44 = vld [vmem:[%s1] sm:$0xf]
    %v45 = vld [vmem:[%s1 + $0x4] sm:$0xf]
    %v46 = vld [vmem:[%s1 + $0x8] sm:$0xf]
    %v47 = vld [vmem:[%s1 + $0xc] sm:$0xf]
    %v48 = vld [vmem:[%s1 + $0x10] sm:$0xf]
    %v49 = vld [vmem:[%s1 + $0x14] sm:$0xf]
    %v50 = vld [vmem:[%s2] sm:$0x1]
    %v52 = vperm.slane %v50, 0
    %v70 = vunpack.c.l.b16 %v28
    %v71 = vunpack.c.l.b16 %v29
    %v72 = vunpack.c.l.b16 %v30
    %v73 = vunpack.c.l.b16 %v31
    %v74 = vunpack.c.l.b16 %v32
    %v75 = vunpack.c.l.b16 %v33
    %v76 = vunpack.c.l.b16 %v34
    %v77 = vunpack.c.l.b16 %v35
    %v78 = vunpack.c.l.b16 %v36
    %v79 = vunpack.c.l.b16 %v37
    %v80 = vunpack.c.l.b16 %v38
    %v81 = vunpack.c.l.b16 %v39
    %v82 = vunpack.c.l.b16 %v40
    %v83 = vunpack.c.l.b16 %v41
    %v84 = vunpack.c.l.b16 %v42
    %v85 = vunpack.c.l.b16 %v43
    %v86 = vpack.c.b16 %v71, %v70
    %v87 = vpack.c.b16 %v73, %v72
    %v88 = vpack.c.b16 %v75, %v74
    %v89 = vpack.c.b16 %v77, %v76
    %v90 = vpack.c.b16 %v79, %v78
    %v91 = vpack.c.b16 %v81, %v80
    %v92 = vpack.c.b16 %v83, %v82
    %v93 = vpack.c.b16 %v85, %v84
    %v100 = vunpack.c.l.b16 %v44
    %v101 = vunpack.c.l.b16 %v45
    %v102 = vunpack.c.l.b16 %v46
    %v103 = vunpack.c.l.b16 %v47
    %v104 = vunpack.c.l.b16 %v48
    %v105 = vunpack.c.l.b16 %v49
    %v106 = vpack.c.b16 %v101, %v100
    %v107 = vpack.c.b16 %v103, %v102
    %v108 = vpack.c.b16 %v105, %v104
    %vm112 = vcmask 392192
    %v114 = vsel %vm112, %v86, 0
    %v117 = vsel %vm112, %v87, 0
    %v120 = vsel %vm112, %v88, 0
    %v123 = vsel %vm112, %v89, 0
    %v126 = vsel %vm112, %v90, 0
    %v129 = vsel %vm112, %v91, 0
    %v132 = vsel %vm112, %v92, 0
    %v135 = vsel %vm112, %v93, 0
    %137 = vmatpush.bf16.msra.mxu0 0
    %138 = vmatpush.bf16.msra.mxu0 0
    %139 = vmatpush.bf16.msra.mxu0 0
    %140 = vmatpush.bf16.msra.mxu0 0
    %141 = vmatpush.bf16.msra.mxu0 0
    %142 = vmatpush.bf16.msra.mxu0 %v108
    %143 = vmatpush.bf16.msra.mxu0 %v107
    %144 = vmatpush.bf16.msra.mxu0 %v106
    %145 = vmatmul.bf16.gmra.mxu0 %v114
    %v146 = vpop.f32.mrf.mxu0
    %v147 = vadd.f32 %v52, %v146
    %v148 = vpop.f32.mrf.mxu0
    %v149 = vadd.f32 %v52, %v148
    %150 = vmatmul.bf16.gmra.mxu0 %v117
    %v151 = vpop.f32.mrf.mxu0
    %v152 = vadd.f32 %v52, %v151
    %v153 = vpop.f32.mrf.mxu0
    %v154 = vadd.f32 %v52, %v153
    %155 = vmatmul.bf16.gmra.mxu0 %v120
    %v156 = vpop.f32.mrf.mxu0
    %v157 = vadd.f32 %v52, %v156
    %v158 = vpop.f32.mrf.mxu0
    %v159 = vadd.f32 %v52, %v158
    %160 = vmatmul.bf16.gmra.mxu0 %v123
    %v161 = vpop.f32.mrf.mxu0
    %v162 = vadd.f32 %v52, %v161
    %v163 = vpop.f32.mrf.mxu0
    %v164 = vadd.f32 %v52, %v163
    %165 = vmatmul.bf16.gmra.mxu0 %v126
    %v166 = vpop.f32.mrf.mxu0
    %v167 = vadd.f32 %v52, %v166
    %v168 = vpop.f32.mrf.mxu0
    %v169 = vadd.f32 %v52, %v168
    %170 = vmatmul.bf16.gmra.mxu0 %v129
    %v171 = vpop.f32.mrf.mxu0
    %v172 = vadd.f32 %v52, %v171
    %v173 = vpop.f32.mrf.mxu0
    %v174 = vadd.f32 %v52, %v173
    %175 = vmatmul.bf16.gmra.mxu0 %v132
    %v176 = vpop.f32.mrf.mxu0
    %v177 = vadd.f32 %v52, %v176
    %v178 = vpop.f32.mrf.mxu0
    %v179 = vadd.f32 %v52, %v178
    %180 = vmatmul.bf16.gmra.mxu0 %v135
    %v181 = vpop.f32.mrf.mxu0
    %v182 = vadd.f32 %v52, %v181
    %v183 = vpop.f32.mrf.mxu0
    %v184 = vadd.f32 %v52, %v183
    %185 = vdwg.mxu0
    %v186 = vmax.f32 %v147, 0.0
    %v187 = vmax.f32 %v149, 0.0
    %v188 = vmax.f32 %v152, 0.0
    %v189 = vmax.f32 %v154, 0.0
    %v190 = vmax.f32 %v157, 0.0
    %v191 = vmax.f32 %v159, 0.0
    %v192 = vmax.f32 %v162, 0.0
    %v193 = vmax.f32 %v164, 0.0
    %v194 = vmax.f32 %v167, 0.0
    %v195 = vmax.f32 %v169, 0.0
    %v196 = vmax.f32 %v172, 0.0
    %v197 = vmax.f32 %v174, 0.0
    %v198 = vmax.f32 %v177, 0.0
    %v199 = vmax.f32 %v179, 0.0
    %v200 = vmax.f32 %v182, 0.0
    %v201 = vmax.f32 %v184, 0.0
    %v202 = vmax.f32 %v186, %v188
    %v203 = vmax.f32 %v187, %v189
    %v204 = vmax.f32 %v202, %v190
    %v205 = vmax.f32 %v203, %v191
    %v206 = vmax.f32 %v204, %v192
    %v207 = vmax.f32 %v205, %v193
    %v208 = vmax.f32 %v206, %v207
    %v209 = vrot.slane %v208, 4
    %v210 = vmax.f32 %v208, %v209
    %v211 = vrot.slane %v210, 2
    %v212 = vmax.f32 %v210, %v211
    %v213 = vrot.slane %v212, 1
    %v214 = vmax.f32 %v212, %v213
    %v215 = vmax.f32 %v194, %v196
    %v216 = vmax.f32 %v195, %v197
    %v217 = vmax.f32 %v215, %v198
    %v218 = vmax.f32 %v216, %v199
    %v219 = vmax.f32 %v217, %v200
    %v220 = vmax.f32 %v218, %v201
    %v221 = vmax.f32 %v219, %v220
    %v222 = vrot.slane %v221, 4
    %v223 = vmax.f32 %v221, %v222
    %v224 = vrot.slane %v223, 2
    %v225 = vmax.f32 %v223, %v224
    %v226 = vrot.slane %v225, 1
    %v227 = vmax.f32 %v225, %v226
    %v228 = vld [vmem:[%s3] sm:$0xf]
    %v229 = vld [vmem:[%s3 + $0x4] sm:$0xf]
    %v230 = vld [vmem:[%s3 + $0x8] sm:$0xf]
    %v231 = vld [vmem:[%s3 + $0xc] sm:$0xf]
    %v232 = vld [vmem:[%s3 + $0x10] sm:$0xf]
    %v233 = vld [vmem:[%s3 + $0x14] sm:$0xf]
    %v234 = vld [vmem:[%s3 + $0x18] sm:$0xf]
    %v235 = vld [vmem:[%s3 + $0x1c] sm:$0xf]
    %v236 = vld [vmem:[%s3 + $0x20] sm:$0xf]
    %v237 = vld [vmem:[%s3 + $0x24] sm:$0xf]
    %v238 = vld [vmem:[%s3 + $0x28] sm:$0xf]
    %v239 = vld [vmem:[%s3 + $0x2c] sm:$0xf]
    %v240 = vld [vmem:[%s3 + $0x30] sm:$0xf]
    %v241 = vld [vmem:[%s3 + $0x34] sm:$0xf]
    %v242 = vld [vmem:[%s3 + $0x38] sm:$0xf]
    %v243 = vld [vmem:[%s3 + $0x3c] sm:$0xf]
    %v244 = vunpack.c.l.bf16 %v228
    %v245 = vunpack.c.l.bf16 %v229
    %v246 = vunpack.c.l.bf16 %v230
    %v247 = vunpack.c.l.bf16 %v231
    %v248 = vunpack.c.l.bf16 %v232
    %v249 = vunpack.c.l.bf16 %v233
    %v250 = vunpack.c.l.bf16 %v234
    %v251 = vunpack.c.l.bf16 %v235
    %v252 = vunpack.c.l.bf16 %v236
    %v253 = vunpack.c.l.bf16 %v237
    %v254 = vunpack.c.l.bf16 %v238
    %v255 = vunpack.c.l.bf16 %v239
    %v256 = vunpack.c.l.bf16 %v240
    %v257 = vunpack.c.l.bf16 %v241
    %v258 = vunpack.c.l.bf16 %v242
    %v259 = vunpack.c.l.bf16 %v243
    %s260 = scalar_lea.vmem %s0, 64
    %v261 = vld [vmem:[%s260] sm:$0xf]
    %v262 = vld [vmem:[%s260 + $0x4] sm:$0xf]
    %v263 = vld [vmem:[%s260 + $0x8] sm:$0xf]
    %v264 = vld [vmem:[%s260 + $0xc] sm:$0xf]
    %v265 = vld [vmem:[%s260 + $0x10] sm:$0xf]
    %v266 = vld [vmem:[%s260 + $0x14] sm:$0xf]
    %v267 = vld [vmem:[%s260 + $0x18] sm:$0xf]
    %v268 = vld [vmem:[%s260 + $0x1c] sm:$0xf]
    %v269 = vld [vmem:[%s260 + $0x20] sm:$0xf]
    %v270 = vld [vmem:[%s260 + $0x24] sm:$0xf]
    %v271 = vld [vmem:[%s260 + $0x28] sm:$0xf]
    %v272 = vld [vmem:[%s260 + $0x2c] sm:$0xf]
    %v273 = vld [vmem:[%s260 + $0x30] sm:$0xf]
    %v274 = vld [vmem:[%s260 + $0x34] sm:$0xf]
    %v275 = vld [vmem:[%s260 + $0x38] sm:$0xf]
    %v276 = vld [vmem:[%s260 + $0x3c] sm:$0xf]
    %v293 = vunpack.c.l.b16 %v261
    %v294 = vunpack.c.l.b16 %v262
    %v295 = vunpack.c.l.b16 %v263
    %v296 = vunpack.c.l.b16 %v264
    %v297 = vunpack.c.l.b16 %v265
    %v298 = vunpack.c.l.b16 %v266
    %v299 = vunpack.c.l.b16 %v267
    %v300 = vunpack.c.l.b16 %v268
    %v301 = vunpack.c.l.b16 %v269
    %v302 = vunpack.c.l.b16 %v270
    %v303 = vunpack.c.l.b16 %v271
    %v304 = vunpack.c.l.b16 %v272
    %v305 = vunpack.c.l.b16 %v273
    %v306 = vunpack.c.l.b16 %v274
    %v307 = vunpack.c.l.b16 %v275
    %v308 = vunpack.c.l.b16 %v276
    %v309 = vpack.c.b16 %v294, %v293
    %v310 = vpack.c.b16 %v296, %v295
    %v311 = vpack.c.b16 %v298, %v297
    %v312 = vpack.c.b16 %v300, %v299
    %v313 = vpack.c.b16 %v302, %v301
    %v314 = vpack.c.b16 %v304, %v303
    %v315 = vpack.c.b16 %v306, %v305
    %v316 = vpack.c.b16 %v308, %v307
    %v318 = vsel %vm112, %v309, 0
    %v321 = vsel %vm112, %v310, 0
    %v324 = vsel %vm112, %v311, 0
    %v327 = vsel %vm112, %v312, 0
    %v330 = vsel %vm112, %v313, 0
    %v333 = vsel %vm112, %v314, 0
    %v336 = vsel %vm112, %v315, 0
    %v339 = vsel %vm112, %v316, 0
    %341 = vmatpush.bf16.msra.mxu0 0
    %342 = vmatpush.bf16.msra.mxu0 0
    %343 = vmatpush.bf16.msra.mxu0 0
    %344 = vmatpush.bf16.msra.mxu0 0
    %345 = vmatpush.bf16.msra.mxu0 0
    %346 = vmatpush.bf16.msra.mxu0 %v108
    %347 = vmatpush.bf16.msra.mxu0 %v107
    %348 = vmatpush.bf16.msra.mxu0 %v106
    %349 = vmatmul.bf16.gmra.mxu0 %v318
    %v350 = vpop.f32.mrf.mxu0
    %v351 = vadd.f32 %v52, %v350
    %v352 = vpop.f32.mrf.mxu0
    %v353 = vadd.f32 %v52, %v352
    %354 = vmatmul.bf16.gmra.mxu0 %v321
    %v355 = vpop.f32.mrf.mxu0
    %v356 = vadd.f32 %v52, %v355
    %v357 = vpop.f32.mrf.mxu0
    %v358 = vadd.f32 %v52, %v357
    %359 = vmatmul.bf16.gmra.mxu0 %v324
    %v360 = vpop.f32.mrf.mxu0
    %v361 = vadd.f32 %v52, %v360
    %v362 = vpop.f32.mrf.mxu0
    %v363 = vadd.f32 %v52, %v362
    %364 = vmatmul.bf16.gmra.mxu0 %v327
    %v365 = vpop.f32.mrf.mxu0
    %v366 = vadd.f32 %v52, %v365
    %v367 = vpop.f32.mrf.mxu0
    %v368 = vadd.f32 %v52, %v367
    %369 = vmatmul.bf16.gmra.mxu0 %v330
    %v370 = vpop.f32.mrf.mxu0
    %v371 = vadd.f32 %v52, %v370
    %v372 = vpop.f32.mrf.mxu0
    %v373 = vadd.f32 %v52, %v372
    %374 = vmatmul.bf16.gmra.mxu0 %v333
    %v375 = vpop.f32.mrf.mxu0
    %v376 = vadd.f32 %v52, %v375
    %v377 = vpop.f32.mrf.mxu0
    %v378 = vadd.f32 %v52, %v377
    %379 = vmatmul.bf16.gmra.mxu0 %v336
    %v380 = vpop.f32.mrf.mxu0
    %v381 = vadd.f32 %v52, %v380
    %v382 = vpop.f32.mrf.mxu0
    %v383 = vadd.f32 %v52, %v382
    %384 = vmatmul.bf16.gmra.mxu0 %v339
    %v385 = vpop.f32.mrf.mxu0
    %v386 = vadd.f32 %v52, %v385
    %v387 = vpop.f32.mrf.mxu0
    %v388 = vadd.f32 %v52, %v387
    %389 = vdwg.mxu0
    %v390 = vmax.f32 %v351, 0.0
    %v391 = vmax.f32 %v353, 0.0
    %v392 = vmax.f32 %v356, 0.0
    %v393 = vmax.f32 %v358, 0.0
    %v394 = vmax.f32 %v361, 0.0
    %v395 = vmax.f32 %v363, 0.0
    %v396 = vmax.f32 %v366, 0.0
    %v397 = vmax.f32 %v368, 0.0
    %v398 = vmax.f32 %v371, 0.0
    %v399 = vmax.f32 %v373, 0.0
    %v400 = vmax.f32 %v376, 0.0
    %v401 = vmax.f32 %v378, 0.0
    %v402 = vmax.f32 %v381, 0.0
    %v403 = vmax.f32 %v383, 0.0
    %v404 = vmax.f32 %v386, 0.0
    %v405 = vmax.f32 %v388, 0.0
    %v406 = vmax.f32 %v390, %v392
    %v407 = vmax.f32 %v391, %v393
    %v408 = vmax.f32 %v406, %v394
    %v409 = vmax.f32 %v407, %v395
    %v410 = vmax.f32 %v408, %v396
    %v411 = vmax.f32 %v409, %v397
    %v412 = vmax.f32 %v410, %v411
    %v413 = vrot.slane %v412, 4
    %v414 = vmax.f32 %v412, %v413
    %v415 = vrot.slane %v414, 2
    %v416 = vmax.f32 %v414, %v415
    %v417 = vrot.slane %v416, 1
    %v418 = vmax.f32 %v416, %v417
    %v419 = vmax.f32 %v398, %v400
    %v420 = vmax.f32 %v399, %v401
    %v421 = vmax.f32 %v419, %v402
    %v422 = vmax.f32 %v420, %v403
    %v423 = vmax.f32 %v421, %v404
    %v424 = vmax.f32 %v422, %v405
    %v425 = vmax.f32 %v423, %v424
    %v426 = vrot.slane %v425, 4
    %v427 = vmax.f32 %v425, %v426
    %v428 = vrot.slane %v427, 2
    %v429 = vmax.f32 %v427, %v428
    %v430 = vrot.slane %v429, 1
    %v431 = vmax.f32 %v429, %v430
    %s432 = scalar_lea.vmem %s3, 64
    %v433 = vld [vmem:[%s432] sm:$0xf]
    %v434 = vld [vmem:[%s432 + $0x4] sm:$0xf]
    %v435 = vld [vmem:[%s432 + $0x8] sm:$0xf]
    %v436 = vld [vmem:[%s432 + $0xc] sm:$0xf]
    %v437 = vld [vmem:[%s432 + $0x10] sm:$0xf]
    %v438 = vld [vmem:[%s432 + $0x14] sm:$0xf]
    %v439 = vld [vmem:[%s432 + $0x18] sm:$0xf]
    %v440 = vld [vmem:[%s432 + $0x1c] sm:$0xf]
    %v441 = vld [vmem:[%s432 + $0x20] sm:$0xf]
    %v442 = vld [vmem:[%s432 + $0x24] sm:$0xf]
    %v443 = vld [vmem:[%s432 + $0x28] sm:$0xf]
    %v444 = vld [vmem:[%s432 + $0x2c] sm:$0xf]
    %v445 = vld [vmem:[%s432 + $0x30] sm:$0xf]
    %v446 = vld [vmem:[%s432 + $0x34] sm:$0xf]
    %v447 = vld [vmem:[%s432 + $0x38] sm:$0xf]
    %v448 = vld [vmem:[%s432 + $0x3c] sm:$0xf]
    %v449 = vunpack.c.l.bf16 %v433
    %v450 = vunpack.c.l.bf16 %v434
    %v451 = vunpack.c.l.bf16 %v435
    %v452 = vunpack.c.l.bf16 %v436
    %v453 = vunpack.c.l.bf16 %v437
    %v454 = vunpack.c.l.bf16 %v438
    %v455 = vunpack.c.l.bf16 %v439
    %v456 = vunpack.c.l.bf16 %v440
    %v457 = vunpack.c.l.bf16 %v441
    %v458 = vunpack.c.l.bf16 %v442
    %v459 = vunpack.c.l.bf16 %v443
    %v460 = vunpack.c.l.bf16 %v444
    %v461 = vunpack.c.l.bf16 %v445
    %v462 = vunpack.c.l.bf16 %v446
    %v463 = vunpack.c.l.bf16 %v447
    %v464 = vunpack.c.l.bf16 %v448
    %vm467 = vcmask 1041409
    %v468 = vsel %vm467, %v431, %v418
    %470 = vmatpush.msra.mxu0 %v464
    %471 = vmatpush.msra.mxu0 %v463
    %472 = vmatpush.msra.mxu0 %v462
    %473 = vmatpush.msra.mxu0 %v461
    %474 = vmatpush.msra.mxu0 %v460
    %475 = vmatpush.msra.mxu0 %v459
    %476 = vmatpush.msra.mxu0 %v458
    %477 = vmatpush.msra.mxu0 %v457
    %478 = vmatpush.msra.mxu0 %v456
    %479 = vmatpush.msra.mxu0 %v455
    %480 = vmatpush.msra.mxu0 %v454
    %481 = vmatpush.msra.mxu0 %v453
    %482 = vmatpush.msra.mxu0 %v452
    %483 = vmatpush.msra.mxu0 %v451
    %484 = vmatpush.msra.mxu0 %v450
    %485 = vmatpush.msra.mxu0 %v449
    %486 = vmatmul.f32.gmra.mxu0 %v468
    %v487 = vpop.f32.mrf.mxu0
    %v488 = vadd.f32 0.0, %v487
    %489 = vdwg.mxu0
    %v492 = vsel %vm467, %v227, %v214
    %494 = vmatpush.msra.mxu0 %v259
    %495 = vmatpush.msra.mxu0 %v258
    %496 = vmatpush.msra.mxu0 %v257
    %497 = vmatpush.msra.mxu0 %v256
    %498 = vmatpush.msra.mxu0 %v255
    %499 = vmatpush.msra.mxu0 %v254
    %500 = vmatpush.msra.mxu0 %v253
    %501 = vmatpush.msra.mxu0 %v252
    %502 = vmatpush.msra.mxu0 %v251
    %503 = vmatpush.msra.mxu0 %v250
    %504 = vmatpush.msra.mxu0 %v249
    %505 = vmatpush.msra.mxu0 %v248
    %506 = vmatpush.msra.mxu0 %v247
    %507 = vmatpush.msra.mxu0 %v246
    %508 = vmatpush.msra.mxu0 %v245
    %509 = vmatpush.msra.mxu0 %v244
    %510 = vmatmul.f32.gmra.mxu0 %v492
    %v511 = vpop.f32.mrf.mxu0
    %v512 = vadd.f32 %v488, %v511
    %513 = vdwg.mxu0
    %s514 = scalar_lea.vmem %s0, 128
    %v515 = vld [vmem:[%s514] sm:$0xf]
    %v516 = vld [vmem:[%s514 + $0x4] sm:$0xf]
    %v517 = vld [vmem:[%s514 + $0x8] sm:$0xf]
    %v518 = vld [vmem:[%s514 + $0xc] sm:$0xf]
    %v519 = vld [vmem:[%s514 + $0x10] sm:$0xf]
    %v520 = vld [vmem:[%s514 + $0x14] sm:$0xf]
    %v521 = vld [vmem:[%s514 + $0x18] sm:$0xf]
    %v522 = vld [vmem:[%s514 + $0x1c] sm:$0xf]
    %v523 = vld [vmem:[%s514 + $0x20] sm:$0xf]
    %v524 = vld [vmem:[%s514 + $0x24] sm:$0xf]
    %v525 = vld [vmem:[%s514 + $0x28] sm:$0xf]
    %v526 = vld [vmem:[%s514 + $0x2c] sm:$0xf]
    %v527 = vld [vmem:[%s514 + $0x30] sm:$0xf]
    %v528 = vld [vmem:[%s514 + $0x34] sm:$0xf]
    %v529 = vld [vmem:[%s514 + $0x38] sm:$0xf]
    %v530 = vld [vmem:[%s514 + $0x3c] sm:$0xf]
    %v547 = vunpack.c.l.b16 %v515
    %v548 = vunpack.c.l.b16 %v516
    %v549 = vunpack.c.l.b16 %v517
    %v550 = vunpack.c.l.b16 %v518
    %v551 = vunpack.c.l.b16 %v519
    %v552 = vunpack.c.l.b16 %v520
    %v553 = vunpack.c.l.b16 %v521
    %v554 = vunpack.c.l.b16 %v522
    %v555 = vunpack.c.l.b16 %v523
    %v556 = vunpack.c.l.b16 %v524
    %v557 = vunpack.c.l.b16 %v525
    %v558 = vunpack.c.l.b16 %v526
    %v559 = vunpack.c.l.b16 %v527
    %v560 = vunpack.c.l.b16 %v528
    %v561 = vunpack.c.l.b16 %v529
    %v562 = vunpack.c.l.b16 %v530
    %v563 = vpack.c.b16 %v548, %v547
    %v564 = vpack.c.b16 %v550, %v549
    %v565 = vpack.c.b16 %v552, %v551
    %v566 = vpack.c.b16 %v554, %v553
    %v567 = vpack.c.b16 %v556, %v555
    %v568 = vpack.c.b16 %v558, %v557
    %v569 = vpack.c.b16 %v560, %v559
    %v570 = vpack.c.b16 %v562, %v561
    %v572 = vsel %vm112, %v563, 0
    %v575 = vsel %vm112, %v564, 0
    %v578 = vsel %vm112, %v565, 0
    %v581 = vsel %vm112, %v566, 0
    %v584 = vsel %vm112, %v567, 0
    %v587 = vsel %vm112, %v568, 0
    %v590 = vsel %vm112, %v569, 0
    %v593 = vsel %vm112, %v570, 0
    %595 = vmatpush.bf16.msra.mxu0 0
    %596 = vmatpush.bf16.msra.mxu0 0
    %597 = vmatpush.bf16.msra.mxu0 0
    %598 = vmatpush.bf16.msra.mxu0 0
    %599 = vmatpush.bf16.msra.mxu0 0
    %600 = vmatpush.bf16.msra.mxu0 %v108
    %601 = vmatpush.bf16.msra.mxu0 %v107
    %602 = vmatpush.bf16.msra.mxu0 %v106
    %603 = vmatmul.bf16.gmra.mxu0 %v572
    %v604 = vpop.f32.mrf.mxu0
    %v605 = vadd.f32 %v52, %v604
    %v606 = vpop.f32.mrf.mxu0
    %v607 = vadd.f32 %v52, %v606
    %608 = vmatmul.bf16.gmra.mxu0 %v575
    %v609 = vpop.f32.mrf.mxu0
    %v610 = vadd.f32 %v52, %v609
    %v611 = vpop.f32.mrf.mxu0
    %v612 = vadd.f32 %v52, %v611
    %613 = vmatmul.bf16.gmra.mxu0 %v578
    %v614 = vpop.f32.mrf.mxu0
    %v615 = vadd.f32 %v52, %v614
    %v616 = vpop.f32.mrf.mxu0
    %v617 = vadd.f32 %v52, %v616
    %618 = vmatmul.bf16.gmra.mxu0 %v581
    %v619 = vpop.f32.mrf.mxu0
    %v620 = vadd.f32 %v52, %v619
    %v621 = vpop.f32.mrf.mxu0
    %v622 = vadd.f32 %v52, %v621
    %623 = vmatmul.bf16.gmra.mxu0 %v584
    %v624 = vpop.f32.mrf.mxu0
    %v625 = vadd.f32 %v52, %v624
    %v626 = vpop.f32.mrf.mxu0
    %v627 = vadd.f32 %v52, %v626
    %628 = vmatmul.bf16.gmra.mxu0 %v587
    %v629 = vpop.f32.mrf.mxu0
    %v630 = vadd.f32 %v52, %v629
    %v631 = vpop.f32.mrf.mxu0
    %v632 = vadd.f32 %v52, %v631
    %633 = vmatmul.bf16.gmra.mxu0 %v590
    %v634 = vpop.f32.mrf.mxu0
    %v635 = vadd.f32 %v52, %v634
    %v636 = vpop.f32.mrf.mxu0
    %v637 = vadd.f32 %v52, %v636
    %638 = vmatmul.bf16.gmra.mxu0 %v593
    %v639 = vpop.f32.mrf.mxu0
    %v640 = vadd.f32 %v52, %v639
    %v641 = vpop.f32.mrf.mxu0
    %v642 = vadd.f32 %v52, %v641
    %643 = vdwg.mxu0
    %v644 = vmax.f32 %v605, 0.0
    %v645 = vmax.f32 %v607, 0.0
    %v646 = vmax.f32 %v610, 0.0
    %v647 = vmax.f32 %v612, 0.0
    %v648 = vmax.f32 %v615, 0.0
    %v649 = vmax.f32 %v617, 0.0
    %v650 = vmax.f32 %v620, 0.0
    %v651 = vmax.f32 %v622, 0.0
    %v652 = vmax.f32 %v625, 0.0
    %v653 = vmax.f32 %v627, 0.0
    %v654 = vmax.f32 %v630, 0.0
    %v655 = vmax.f32 %v632, 0.0
    %v656 = vmax.f32 %v635, 0.0
    %v657 = vmax.f32 %v637, 0.0
    %v658 = vmax.f32 %v640, 0.0
    %v659 = vmax.f32 %v642, 0.0
    %v660 = vmax.f32 %v644, %v646
    %v661 = vmax.f32 %v645, %v647
    %v662 = vmax.f32 %v660, %v648
    %v663 = vmax.f32 %v661, %v649
    %v664 = vmax.f32 %v662, %v650
    %v665 = vmax.f32 %v663, %v651
    %v666 = vmax.f32 %v664, %v665
    %v667 = vrot.slane %v666, 4
    %v668 = vmax.f32 %v666, %v667
    %v669 = vrot.slane %v668, 2
    %v670 = vmax.f32 %v668, %v669
    %v671 = vrot.slane %v670, 1
    %v672 = vmax.f32 %v670, %v671
    %v673 = vmax.f32 %v652, %v654
    %v674 = vmax.f32 %v653, %v655
    %v675 = vmax.f32 %v673, %v656
    %v676 = vmax.f32 %v674, %v657
    %v677 = vmax.f32 %v675, %v658
    %v678 = vmax.f32 %v676, %v659
    %v679 = vmax.f32 %v677, %v678
    %v680 = vrot.slane %v679, 4
    %v681 = vmax.f32 %v679, %v680
    %v682 = vrot.slane %v681, 2
    %v683 = vmax.f32 %v681, %v682
    %v684 = vrot.slane %v683, 1
    %v685 = vmax.f32 %v683, %v684
    %s686 = scalar_lea.vmem %s3, 128
    %v687 = vld [vmem:[%s686] sm:$0xf]
    %v688 = vld [vmem:[%s686 + $0x4] sm:$0xf]
    %v689 = vld [vmem:[%s686 + $0x8] sm:$0xf]
    %v690 = vld [vmem:[%s686 + $0xc] sm:$0xf]
    %v691 = vld [vmem:[%s686 + $0x10] sm:$0xf]
    %v692 = vld [vmem:[%s686 + $0x14] sm:$0xf]
    %v693 = vld [vmem:[%s686 + $0x18] sm:$0xf]
    %v694 = vld [vmem:[%s686 + $0x1c] sm:$0xf]
    %v695 = vld [vmem:[%s686 + $0x20] sm:$0xf]
    %v696 = vld [vmem:[%s686 + $0x24] sm:$0xf]
    %v697 = vld [vmem:[%s686 + $0x28] sm:$0xf]
    %v698 = vld [vmem:[%s686 + $0x2c] sm:$0xf]
    %v699 = vld [vmem:[%s686 + $0x30] sm:$0xf]
    %v700 = vld [vmem:[%s686 + $0x34] sm:$0xf]
    %v701 = vld [vmem:[%s686 + $0x38] sm:$0xf]
    %v702 = vld [vmem:[%s686 + $0x3c] sm:$0xf]
    %v703 = vunpack.c.l.bf16 %v687
    %v704 = vunpack.c.l.bf16 %v688
    %v705 = vunpack.c.l.bf16 %v689
    %v706 = vunpack.c.l.bf16 %v690
    %v707 = vunpack.c.l.bf16 %v691
    %v708 = vunpack.c.l.bf16 %v692
    %v709 = vunpack.c.l.bf16 %v693
    %v710 = vunpack.c.l.bf16 %v694
    %v711 = vunpack.c.l.bf16 %v695
    %v712 = vunpack.c.l.bf16 %v696
    %v713 = vunpack.c.l.bf16 %v697
    %v714 = vunpack.c.l.bf16 %v698
    %v715 = vunpack.c.l.bf16 %v699
    %v716 = vunpack.c.l.bf16 %v700
    %v717 = vunpack.c.l.bf16 %v701
    %v718 = vunpack.c.l.bf16 %v702
    %v721 = vsel %vm467, %v685, %v672
    %723 = vmatpush.msra.mxu0 %v718
    %724 = vmatpush.msra.mxu0 %v717
    %725 = vmatpush.msra.mxu0 %v716
    %726 = vmatpush.msra.mxu0 %v715
    %727 = vmatpush.msra.mxu0 %v714
    %728 = vmatpush.msra.mxu0 %v713
    %729 = vmatpush.msra.mxu0 %v712
    %730 = vmatpush.msra.mxu0 %v711
    %731 = vmatpush.msra.mxu0 %v710
    %732 = vmatpush.msra.mxu0 %v709
    %733 = vmatpush.msra.mxu0 %v708
    %734 = vmatpush.msra.mxu0 %v707
    %735 = vmatpush.msra.mxu0 %v706
    %736 = vmatpush.msra.mxu0 %v705
    %737 = vmatpush.msra.mxu0 %v704
    %738 = vmatpush.msra.mxu0 %v703
    %739 = vmatmul.f32.gmra.mxu0 %v721
    %v740 = vpop.f32.mrf.mxu0
    %v741 = vadd.f32 0.0, %v740
    %742 = vdwg.mxu0
    %v743 = vadd.f32 %v512, %v741
    %s744 = scalar_lea.vmem %s0, 192
    %v745 = vld [vmem:[%s744] sm:$0xf]
    %v746 = vld [vmem:[%s744 + $0x4] sm:$0xf]
    %v747 = vld [vmem:[%s744 + $0x8] sm:$0xf]
    %v748 = vld [vmem:[%s744 + $0xc] sm:$0xf]
    %v749 = vld [vmem:[%s744 + $0x10] sm:$0xf]
    %v750 = vld [vmem:[%s744 + $0x14] sm:$0xf]
    %v751 = vld [vmem:[%s744 + $0x18] sm:$0xf]
    %v752 = vld [vmem:[%s744 + $0x1c] sm:$0xf]
    %v753 = vld [vmem:[%s744 + $0x20] sm:$0xf]
    %v754 = vld [vmem:[%s744 + $0x24] sm:$0xf]
    %v755 = vld [vmem:[%s744 + $0x28] sm:$0xf]
    %v756 = vld [vmem:[%s744 + $0x2c] sm:$0xf]
    %v757 = vld [vmem:[%s744 + $0x30] sm:$0xf]
    %v758 = vld [vmem:[%s744 + $0x34] sm:$0xf]
    %v759 = vld [vmem:[%s744 + $0x38] sm:$0xf]
    %v760 = vld [vmem:[%s744 + $0x3c] sm:$0xf]
    %v777 = vunpack.c.l.b16 %v745
    %v778 = vunpack.c.l.b16 %v746
    %v779 = vunpack.c.l.b16 %v747
    %v780 = vunpack.c.l.b16 %v748
    %v781 = vunpack.c.l.b16 %v749
    %v782 = vunpack.c.l.b16 %v750
    %v783 = vunpack.c.l.b16 %v751
    %v784 = vunpack.c.l.b16 %v752
    %v785 = vunpack.c.l.b16 %v753
    %v786 = vunpack.c.l.b16 %v754
    %v787 = vunpack.c.l.b16 %v755
    %v788 = vunpack.c.l.b16 %v756
    %v789 = vunpack.c.l.b16 %v757
    %v790 = vunpack.c.l.b16 %v758
    %v791 = vunpack.c.l.b16 %v759
    %v792 = vunpack.c.l.b16 %v760
    %v793 = vpack.c.b16 %v778, %v777
    %v794 = vpack.c.b16 %v780, %v779
    %v795 = vpack.c.b16 %v782, %v781
    %v796 = vpack.c.b16 %v784, %v783
    %v797 = vpack.c.b16 %v786, %v785
    %v798 = vpack.c.b16 %v788, %v787
    %v799 = vpack.c.b16 %v790, %v789
    %v800 = vpack.c.b16 %v792, %v791
    %v802 = vsel %vm112, %v793, 0
    %v805 = vsel %vm112, %v794, 0
    %v808 = vsel %vm112, %v795, 0
    %v811 = vsel %vm112, %v796, 0
    %v814 = vsel %vm112, %v797, 0
    %v817 = vsel %vm112, %v798, 0
    %v820 = vsel %vm112, %v799, 0
    %v823 = vsel %vm112, %v800, 0
    %825 = vmatpush.bf16.msra.mxu0 0
    %826 = vmatpush.bf16.msra.mxu0 0
    %827 = vmatpush.bf16.msra.mxu0 0
    %828 = vmatpush.bf16.msra.mxu0 0
    %829 = vmatpush.bf16.msra.mxu0 0
    %830 = vmatpush.bf16.msra.mxu0 %v108
    %831 = vmatpush.bf16.msra.mxu0 %v107
    %832 = vmatpush.bf16.msra.mxu0 %v106
    %833 = vmatmul.bf16.gmra.mxu0 %v802
    %v834 = vpop.f32.mrf.mxu0
    %v835 = vadd.f32 %v52, %v834
    %v836 = vpop.f32.mrf.mxu0
    %v837 = vadd.f32 %v52, %v836
    %838 = vmatmul.bf16.gmra.mxu0 %v805
    %v839 = vpop.f32.mrf.mxu0
    %v840 = vadd.f32 %v52, %v839
    %v841 = vpop.f32.mrf.mxu0
    %v842 = vadd.f32 %v52, %v841
    %843 = vmatmul.bf16.gmra.mxu0 %v808
    %v844 = vpop.f32.mrf.mxu0
    %v845 = vadd.f32 %v52, %v844
    %v846 = vpop.f32.mrf.mxu0
    %v847 = vadd.f32 %v52, %v846
    %848 = vmatmul.bf16.gmra.mxu0 %v811
    %v849 = vpop.f32.mrf.mxu0
    %v850 = vadd.f32 %v52, %v849
    %v851 = vpop.f32.mrf.mxu0
    %v852 = vadd.f32 %v52, %v851
    %853 = vmatmul.bf16.gmra.mxu0 %v814
    %v854 = vpop.f32.mrf.mxu0
    %v855 = vadd.f32 %v52, %v854
    %v856 = vpop.f32.mrf.mxu0
    %v857 = vadd.f32 %v52, %v856
    %858 = vmatmul.bf16.gmra.mxu0 %v817
    %v859 = vpop.f32.mrf.mxu0
    %v860 = vadd.f32 %v52, %v859
    %v861 = vpop.f32.mrf.mxu0
    %v862 = vadd.f32 %v52, %v861
    %863 = vmatmul.bf16.gmra.mxu0 %v820
    %v864 = vpop.f32.mrf.mxu0
    %v865 = vadd.f32 %v52, %v864
    %v866 = vpop.f32.mrf.mxu0
    %v867 = vadd.f32 %v52, %v866
    %868 = vmatmul.bf16.gmra.mxu0 %v823
    %v869 = vpop.f32.mrf.mxu0
    %v870 = vadd.f32 %v52, %v869
    %v871 = vpop.f32.mrf.mxu0
    %v872 = vadd.f32 %v52, %v871
    %873 = vdwg.mxu0
    %v874 = vmax.f32 %v835, 0.0
    %v875 = vmax.f32 %v837, 0.0
    %v876 = vmax.f32 %v840, 0.0
    %v877 = vmax.f32 %v842, 0.0
    %v878 = vmax.f32 %v845, 0.0
    %v879 = vmax.f32 %v847, 0.0
    %v880 = vmax.f32 %v850, 0.0
    %v881 = vmax.f32 %v852, 0.0
    %v882 = vmax.f32 %v855, 0.0
    %v883 = vmax.f32 %v857, 0.0
    %v884 = vmax.f32 %v860, 0.0
    %v885 = vmax.f32 %v862, 0.0
    %v886 = vmax.f32 %v865, 0.0
    %v887 = vmax.f32 %v867, 0.0
    %v888 = vmax.f32 %v870, 0.0
    %v889 = vmax.f32 %v872, 0.0
    %v890 = vmax.f32 %v874, %v876
    %v891 = vmax.f32 %v875, %v877
    %v892 = vmax.f32 %v890, %v878
    %v893 = vmax.f32 %v891, %v879
    %v894 = vmax.f32 %v892, %v880
    %v895 = vmax.f32 %v893, %v881
    %v896 = vmax.f32 %v894, %v895
    %v897 = vrot.slane %v896, 4
    %v898 = vmax.f32 %v896, %v897
    %v899 = vrot.slane %v898, 2
    %v900 = vmax.f32 %v898, %v899
    %v901 = vrot.slane %v900, 1
    %v902 = vmax.f32 %v900, %v901
    %v903 = vmax.f32 %v882, %v884
    %v904 = vmax.f32 %v883, %v885
    %v905 = vmax.f32 %v903, %v886
    %v906 = vmax.f32 %v904, %v887
    %v907 = vmax.f32 %v905, %v888
    %v908 = vmax.f32 %v906, %v889
    %v909 = vmax.f32 %v907, %v908
    %v910 = vrot.slane %v909, 4
    %v911 = vmax.f32 %v909, %v910
    %v912 = vrot.slane %v911, 2
    %v913 = vmax.f32 %v911, %v912
    %v914 = vrot.slane %v913, 1
    %v915 = vmax.f32 %v913, %v914
    %s916 = scalar_lea.vmem %s3, 192
    %v917 = vld [vmem:[%s916] sm:$0xf]
    %v918 = vld [vmem:[%s916 + $0x4] sm:$0xf]
    %v919 = vld [vmem:[%s916 + $0x8] sm:$0xf]
    %v920 = vld [vmem:[%s916 + $0xc] sm:$0xf]
    %v921 = vld [vmem:[%s916 + $0x10] sm:$0xf]
    %v922 = vld [vmem:[%s916 + $0x14] sm:$0xf]
    %v923 = vld [vmem:[%s916 + $0x18] sm:$0xf]
    %v924 = vld [vmem:[%s916 + $0x1c] sm:$0xf]
    %v925 = vld [vmem:[%s916 + $0x20] sm:$0xf]
    %v926 = vld [vmem:[%s916 + $0x24] sm:$0xf]
    %v927 = vld [vmem:[%s916 + $0x28] sm:$0xf]
    %v928 = vld [vmem:[%s916 + $0x2c] sm:$0xf]
    %v929 = vld [vmem:[%s916 + $0x30] sm:$0xf]
    %v930 = vld [vmem:[%s916 + $0x34] sm:$0xf]
    %v931 = vld [vmem:[%s916 + $0x38] sm:$0xf]
    %v932 = vld [vmem:[%s916 + $0x3c] sm:$0xf]
    %v933 = vunpack.c.l.bf16 %v917
    %v934 = vunpack.c.l.bf16 %v918
    %v935 = vunpack.c.l.bf16 %v919
    %v936 = vunpack.c.l.bf16 %v920
    %v937 = vunpack.c.l.bf16 %v921
    %v938 = vunpack.c.l.bf16 %v922
    %v939 = vunpack.c.l.bf16 %v923
    %v940 = vunpack.c.l.bf16 %v924
    %v941 = vunpack.c.l.bf16 %v925
    %v942 = vunpack.c.l.bf16 %v926
    %v943 = vunpack.c.l.bf16 %v927
    %v944 = vunpack.c.l.bf16 %v928
    %v945 = vunpack.c.l.bf16 %v929
    %v946 = vunpack.c.l.bf16 %v930
    %v947 = vunpack.c.l.bf16 %v931
    %v948 = vunpack.c.l.bf16 %v932
    %v951 = vsel %vm467, %v915, %v902
    %953 = vmatpush.msra.mxu0 %v948
    %954 = vmatpush.msra.mxu0 %v947
    %955 = vmatpush.msra.mxu0 %v946
    %956 = vmatpush.msra.mxu0 %v945
    %957 = vmatpush.msra.mxu0 %v944
    %958 = vmatpush.msra.mxu0 %v943
    %959 = vmatpush.msra.mxu0 %v942
    %960 = vmatpush.msra.mxu0 %v941
    %961 = vmatpush.msra.mxu0 %v940
    %962 = vmatpush.msra.mxu0 %v939
    %963 = vmatpush.msra.mxu0 %v938
    %964 = vmatpush.msra.mxu0 %v937
    %965 = vmatpush.msra.mxu0 %v936
    %966 = vmatpush.msra.mxu0 %v935
    %967 = vmatpush.msra.mxu0 %v934
    %968 = vmatpush.msra.mxu0 %v933
    %969 = vmatmul.f32.gmra.mxu0 %v951
    %v970 = vpop.f32.mrf.mxu0
    %v971 = vadd.f32 0.0, %v970
    %972 = vdwg.mxu0
    %v973 = vadd.f32 %v743, %v971
    %v974 = vld [vmem:[%s4] sm:$0x1]
    %v976 = vperm.slane %v974, 0
    %v978 = vadd.f32 %v973, %v976
    %v979 = vmax.f32 %v978, 0.0
    %v980 = vld [vmem:[%s5] sm:$0xf]
    %v981 = vld [vmem:[%s5 + $0x4] sm:$0xf]
    %v982 = vld [vmem:[%s5 + $0x8] sm:$0xf]
    %v983 = vld [vmem:[%s5 + $0xc] sm:$0xf]
    %v984 = vld [vmem:[%s5 + $0x10] sm:$0xf]
    %v985 = vld [vmem:[%s5 + $0x14] sm:$0xf]
    %v986 = vld [vmem:[%s5 + $0x18] sm:$0xf]
    %v987 = vld [vmem:[%s5 + $0x1c] sm:$0xf]
    %v988 = vld [vmem:[%s5 + $0x20] sm:$0xf]
    %v989 = vld [vmem:[%s5 + $0x24] sm:$0xf]
    %v990 = vld [vmem:[%s5 + $0x28] sm:$0xf]
    %v991 = vld [vmem:[%s5 + $0x2c] sm:$0xf]
    %v992 = vld [vmem:[%s5 + $0x30] sm:$0xf]
    %v993 = vld [vmem:[%s5 + $0x34] sm:$0xf]
    %v994 = vld [vmem:[%s5 + $0x38] sm:$0xf]
    %v995 = vld [vmem:[%s5 + $0x3c] sm:$0xf]
    %v996 = vunpack.c.l.bf16 %v980
    %v997 = vunpack.c.l.bf16 %v981
    %v998 = vunpack.c.l.bf16 %v982
    %v999 = vunpack.c.l.bf16 %v983
    %v1000 = vunpack.c.l.bf16 %v984
    %v1001 = vunpack.c.l.bf16 %v985
    %v1002 = vunpack.c.l.bf16 %v986
    %v1003 = vunpack.c.l.bf16 %v987
    %v1004 = vunpack.c.l.bf16 %v988
    %v1005 = vunpack.c.l.bf16 %v989
    %v1006 = vunpack.c.l.bf16 %v990
    %v1007 = vunpack.c.l.bf16 %v991
    %v1008 = vunpack.c.l.bf16 %v992
    %v1009 = vunpack.c.l.bf16 %v993
    %v1010 = vunpack.c.l.bf16 %v994
    %v1011 = vunpack.c.l.bf16 %v995
    %v1012 = vld [vmem:[%s6] sm:$0x1]
    %v1014 = vperm.slane %v1012, 0
    %1016 = vmatpush.msra.mxu0 %v1011
    %1017 = vmatpush.msra.mxu0 %v1010
    %1018 = vmatpush.msra.mxu0 %v1009
    %1019 = vmatpush.msra.mxu0 %v1008
    %1020 = vmatpush.msra.mxu0 %v1007
    %1021 = vmatpush.msra.mxu0 %v1006
    %1022 = vmatpush.msra.mxu0 %v1005
    %1023 = vmatpush.msra.mxu0 %v1004
    %1024 = vmatpush.msra.mxu0 %v1003
    %1025 = vmatpush.msra.mxu0 %v1002
    %1026 = vmatpush.msra.mxu0 %v1001
    %1027 = vmatpush.msra.mxu0 %v1000
    %1028 = vmatpush.msra.mxu0 %v999
    %1029 = vmatpush.msra.mxu0 %v998
    %1030 = vmatpush.msra.mxu0 %v997
    %1031 = vmatpush.msra.mxu0 %v996
    %1032 = vmatmul.f32.gmra.mxu0 %v979
    %v1033 = vpop.f32.mrf.mxu0
    %v1034 = vadd.f32 %v1014, %v1033
    %1035 = vdwg.mxu0
    %1036 = vst [vmem:[#allocation2] sm:$0x3] %v1034
    // Predicated region
    $region30: #{vgg_forward.1} parent=1 // pred_check
      _
    $region31: #{vgg_forward.1} parent=1 // pred_check_branch
      %1038 = sbr.rel (0) target = $region33
    $region32: #{vgg_forward.1} parent=1 // pred_region
      %1040 = vsyncadd [#allocation3], 0
      %s1042 = sshll.u32 [#allocation2], 4
      %s1043 = int_to_ptr.vmem [resolvable:$true] %s1042
      %s1044 = sshll.u32 %s7, 4
      %s1045 = int_to_ptr.hbm [resolvable:$true] %s1044
      %1047 = dma.vmem_to_hbm [thread:$0]  %s1043, 32, %s1045, [#allocation3]
    $region33: #{vgg_forward.1} parent=1 // pred_fallthru
      _
    // Predicated region
    $region34: #{vgg_forward.1} parent=1 // pred_check
      _
    $region35: #{vgg_forward.1} parent=1 // pred_check_branch
      %1049 = sbr.rel (0) target = $region37
    $region36: #{vgg_forward.1} parent=1 // pred_region
      %1051 = dma.done [#allocation3], 32
    $region37: #{vgg_forward.1} parent=1 // pred_fallthru
      _
    %1052 = vsyncpa [#allocation3], 1

</llo_original>
